<compile_context>
chip_gen: v5e
topology: v5e:2x2
jax: 0.10.0
libtpu: 0.0.40
codegen_flags: <defaults>
</compile_context>

<pallas_src>
import functools

import jax
import jax.numpy as jnp
from jax.experimental import pallas as pl
from jax.experimental.pallas import tpu as pltpu


def _scalar_nets_kernel(x_ref, w1_ref, b1_ref, w2_ref, b2_ref, out_ref, *,
                        hidden, net_block):
    x = x_ref[...]                                  # (BT, D)
    w1 = w1_ref[...]                                # (D, H*TN), col = h*TN + n

    # Layer 1: one wide MXU matmul per grid step, f32 accumulation.
    h = jnp.dot(x, w1, preferred_element_type=jnp.float32)       # (BT, H*TN)
    h = jnp.maximum(h + b1_ref[...], 0.0)                         # + b1, ReLU (VPU)

    # Layer 2: VPU multiply by packed w2, then group-reduce over the H
    # lane-aligned slices of width TN (pairwise tree of VPU adds).
    h = h * w2_ref[...]                                           # (BT, H*TN)
    parts = [h[:, i * net_block:(i + 1) * net_block] for i in range(hidden)]
    while len(parts) > 1:
        nxt = [parts[j] + parts[j + 1] for j in range(0, len(parts) - 1, 2)]
        if len(parts) % 2:
            nxt.append(parts[-1])
        parts = nxt
    y = parts[0] + b2_ref[...]                                    # (BT, TN)

    out_ref[...] = y.astype(out_ref.dtype)


def _round_up(v, m):
    return (v + m - 1) // m * m


def reconstructed_relu(x, w1, b1, w2, b2, *, net_block=128, batch_block=256):
    """Pallas implementation of ReconstructedRelu.forward.

    x:  (B, D) float32
    w1: (N, D, H), b1: (N, H), w2: (N, H, 1), b2: (N, 1)
    returns (B, N) float32   (== torch.stack([...]).squeeze().T for B>1, N>1)
    """
    assert net_block % 128 == 0, "net_block must be a multiple of 128 lanes"
    assert batch_block % 8 == 0, "batch_block must be a multiple of 8 sublanes"

    B, D = x.shape
    N, _, H = w1.shape
    TN = net_block
    NB = pl.cdiv(N, TN)
    NP = NB * TN

    # --- host-side one-time packing (zeros pad the net axis; discarded later) ---
    pn = NP - N
    w1p = jnp.pad(w1, ((0, pn), (0, 0), (0, 0)))
    b1p = jnp.pad(b1, ((0, pn), (0, 0)))
    w2p = jnp.pad(w2, ((0, pn), (0, 0), (0, 0)))
    b2p = jnp.pad(b2, ((0, pn), (0, 0)))

    # Hidden-major packing inside each net block: column index = h*TN + local_n.
    w1_blk = w1p.reshape(NB, TN, D, H).transpose(0, 2, 3, 1).reshape(NB, D, H * TN)
    b1_blk = b1p.reshape(NB, TN, H).transpose(0, 2, 1).reshape(NB, 1, H * TN)
    w2_blk = w2p[..., 0].reshape(NB, TN, H).transpose(0, 2, 1).reshape(NB, 1, H * TN)
    b2_blk = b2p.reshape(NB, TN)[:, None, :]                      # (NB, 1, TN)

    # --- batch tiling (only when B is large, keeps VMEM bounded on v7x) ---
    if B <= batch_block:
        BT, BP = B, B
        xp = x
    else:
        BT = batch_block
        BP = _round_up(B, BT)
        xp = jnp.pad(x, ((0, BP - B), (0, 0)))
    b_tiles = BP // BT

    kernel = functools.partial(_scalar_nets_kernel, hidden=H, net_block=TN)

    out = pl.pallas_call(
        kernel,
        out_shape=jax.ShapeDtypeStruct((BP, NP), jnp.float32),
        grid=(b_tiles, NB),                       # net axis innermost: x stays resident
        in_specs=[
            pl.BlockSpec((BT, D), lambda bi, ni: (bi, 0)),              # x tile
            pl.BlockSpec((None, D, H * TN), lambda bi, ni: (ni, 0, 0)),  # packed W1 block
            pl.BlockSpec((None, 1, H * TN), lambda bi, ni: (ni, 0, 0)),  # packed b1 block
            pl.BlockSpec((None, 1, H * TN), lambda bi, ni: (ni, 0, 0)),  # packed w2 block
            pl.BlockSpec((None, 1, TN), lambda bi, ni: (ni, 0, 0)),      # packed b2 block
        ],
        out_specs=pl.BlockSpec((BT, TN), lambda bi, ni: (bi, ni)),       # lane-dense store
        compiler_params=pltpu.CompilerParams(
            dimension_semantics=("parallel", "parallel")),
    )(xp, w1_blk, b1_blk, w2_blk, b2_blk)

    return out[:B, :N]


def reconstructed_relu_forward(x, w1, b1, w2, b2, **kw):
    """Mirrors torch's `.squeeze().T` edge cases (drops size-1 batch/net dims)."""
    out = reconstructed_relu(x, w1, b1, w2, b2, **kw)
    if out.shape[0] == 1 or out.shape[1] == 1:
        out = jnp.squeeze(out)
    return out


def reconstructed_relu_ref(x, w1, b1, w2, b2):
    """Pure-JAX reference mirroring the PyTorch semantics (B>1, N>1 case)."""
    h = jnp.maximum(jnp.einsum("bd,ndh->nbh", x, w1) + b1[:, None, :], 0.0)
    y = jnp.einsum("nbh,nho->nbo", h, w2) + b2[:, None, :]        # (N, B, 1)
    return jnp.squeeze(y, axis=-1).T                              # (B, N)


if __name__ == "__main__":
    key = jax.random.PRNGKey(0)

    def make(k, B, D, H, N):
        kx, k1, k2, k3, k4 = jax.random.split(k, 5)
        x = jax.random.normal(kx, (B, D), dtype=jnp.float32)
        w1 = jax.random.normal(k1, (N, D, H), dtype=jnp.float32) * 0.5
        b1 = jax.random.normal(k2, (N, H), dtype=jnp.float32) * 0.1
        w2 = jax.random.normal(k3, (N, H, 1), dtype=jnp.float32) * 0.5
        b2 = jax.random.normal(k4, (N, 1), dtype=jnp.float32) * 0.1
        return x, w1, b1, w2, b2

    ka, kb = jax.random.split(key)

    # Case 1: small shapes matching the original module's typical use.
    args = make(ka, B=8, D=4, H=32, N=4)
    out = jax.block_until_ready(reconstructed_relu(*args))
    ref = jax.block_until_ready(reconstructed_relu_ref(*args))
    assert out.shape == (8, 4), out.shape
    assert jnp.allclose(out, ref, atol=1e-4, rtol=1e-4), (out, ref)

    # Case 2: exercises net-block padding and the batch-tiling path.
    args2 = make(kb, B=48, D=6, H=16, N=200)
    out2 = jax.block_until_ready(reconstructed_relu(*args2, batch_block=32))
    ref2 = jax.block_until_ready(reconstructed_relu_ref(*args2))
    assert out2.shape == (48, 200), out2.shape
    assert jnp.allclose(out2, ref2, atol=1e-4, rtol=1e-4)

    print("KERNEL_OK")
</pallas_src>

<mosaic_0001>
module attributes {stable_mosaic.version = 11 : i64} {
  func.func @_scalar_nets_kernel(%arg0: i32, %arg1: i32, %arg2: memref<8x4xf32, #tpu.memory_space<vmem>>, %arg3: memref<1x4x4096xf32, #tpu.memory_space<vmem>>, %arg4: memref<1x1x4096xf32, #tpu.memory_space<vmem>>, %arg5: memref<1x1x4096xf32, #tpu.memory_space<vmem>>, %arg6: memref<1x1x128xf32, #tpu.memory_space<vmem>>, %arg7: memref<8x128xf32, #tpu.memory_space<vmem>>) attributes {dimension_semantics = [#tpu.dimension_semantics<parallel>, #tpu.dimension_semantics<parallel>], iteration_bounds = array<i64: 1, 1>, scalar_prefetch = 0 : i64, scratch_operands = 0 : i64, tpu.core_type = #tpu.core_type<tc>, window_params = [{transform_indices = @transform_0, window_bounds = array<i64: 8, 4>}, {transform_indices = @transform_1, window_bounds = array<i64: 1, 4, 4096>}, {transform_indices = @transform_2, window_bounds = array<i64: 1, 1, 4096>}, {transform_indices = @transform_3, window_bounds = array<i64: 1, 1, 4096>}, {transform_indices = @transform_4, window_bounds = array<i64: 1, 1, 128>}, {transform_indices = @transform_5, window_bounds = array<i64: 8, 128>}]} {
    %c0 = arith.constant 0 : index
    %c0_0 = arith.constant 0 : index
    %0 = vector.load %arg2[%c0, %c0_0] : memref<8x4xf32, #tpu.memory_space<vmem>>, vector<8x4xf32>
    %c0_1 = arith.constant 0 : index
    %c0_2 = arith.constant 0 : index
    %c0_3 = arith.constant 0 : index
    %1 = vector.load %arg3[%c0_1, %c0_2, %c0_3] : memref<1x4x4096xf32, #tpu.memory_space<vmem>>, vector<1x4x4096xf32>
    %2 = vector.shape_cast %1 : vector<1x4x4096xf32> to vector<4x4096xf32>
    %cst = arith.constant dense<0.000000e+00> : vector<8x4096xf32>
    %3 = tpu.matmul %0, %2, %cst {dimension_numbers = #tpu.dot_dimension_numbers<[1], [0], [0], [1], [0, 0, 1, 1], [], []>} : vector<8x4xf32>, vector<4x4096xf32>, vector<8x4096xf32> -> vector<8x4096xf32>
    %c0_4 = arith.constant 0 : index
    %c0_5 = arith.constant 0 : index
    %c0_6 = arith.constant 0 : index
    %4 = vector.load %arg4[%c0_4, %c0_5, %c0_6] : memref<1x1x4096xf32, #tpu.memory_space<vmem>>, vector<1x1x4096xf32>
    %5 = vector.shape_cast %4 : vector<1x1x4096xf32> to vector<1x4096xf32>
    %6 = vector.broadcast %5 : vector<1x4096xf32> to vector<8x4096xf32>
    %7 = arith.addf %3, %6 : vector<8x4096xf32>
    %cst_7 = arith.constant 0.000000e+00 : f32
    %8 = vector.broadcast %cst_7 : f32 to vector<8x4096xf32>
    %9 = arith.maximumf %7, %8 : vector<8x4096xf32>
    %c0_8 = arith.constant 0 : index
    %c0_9 = arith.constant 0 : index
    %c0_10 = arith.constant 0 : index
    %10 = vector.load %arg5[%c0_8, %c0_9, %c0_10] : memref<1x1x4096xf32, #tpu.memory_space<vmem>>, vector<1x1x4096xf32>
    %11 = vector.shape_cast %10 : vector<1x1x4096xf32> to vector<1x4096xf32>
    %12 = vector.broadcast %11 : vector<1x4096xf32> to vector<8x4096xf32>
    %13 = arith.mulf %9, %12 : vector<8x4096xf32>
    %14 = vector.extract_strided_slice %13 {offsets = [0, 0], sizes = [8, 128], strides = [1, 1]} : vector<8x4096xf32> to vector<8x128xf32>
    %15 = vector.extract_strided_slice %13 {offsets = [0, 128], sizes = [8, 128], strides = [1, 1]} : vector<8x4096xf32> to vector<8x128xf32>
    %16 = vector.extract_strided_slice %13 {offsets = [0, 256], sizes = [8, 128], strides = [1, 1]} : vector<8x4096xf32> to vector<8x128xf32>
    %17 = vector.extract_strided_slice %13 {offsets = [0, 384], sizes = [8, 128], strides = [1, 1]} : vector<8x4096xf32> to vector<8x128xf32>
    %18 = vector.extract_strided_slice %13 {offsets = [0, 512], sizes = [8, 128], strides = [1, 1]} : vector<8x4096xf32> to vector<8x128xf32>
    %19 = vector.extract_strided_slice %13 {offsets = [0, 640], sizes = [8, 128], strides = [1, 1]} : vector<8x4096xf32> to vector<8x128xf32>
    %20 = vector.extract_strided_slice %13 {offsets = [0, 768], sizes = [8, 128], strides = [1, 1]} : vector<8x4096xf32> to vector<8x128xf32>
    %21 = vector.extract_strided_slice %13 {offsets = [0, 896], sizes = [8, 128], strides = [1, 1]} : vector<8x4096xf32> to vector<8x128xf32>
    %22 = vector.extract_strided_slice %13 {offsets = [0, 1024], sizes = [8, 128], strides = [1, 1]} : vector<8x4096xf32> to vector<8x128xf32>
    %23 = vector.extract_strided_slice %13 {offsets = [0, 1152], sizes = [8, 128], strides = [1, 1]} : vector<8x4096xf32> to vector<8x128xf32>
    %24 = vector.extract_strided_slice %13 {offsets = [0, 1280], sizes = [8, 128], strides = [1, 1]} : vector<8x4096xf32> to vector<8x128xf32>
    %25 = vector.extract_strided_slice %13 {offsets = [0, 1408], sizes = [8, 128], strides = [1, 1]} : vector<8x4096xf32> to vector<8x128xf32>
    %26 = vector.extract_strided_slice %13 {offsets = [0, 1536], sizes = [8, 128], strides = [1, 1]} : vector<8x4096xf32> to vector<8x128xf32>
    %27 = vector.extract_strided_slice %13 {offsets = [0, 1664], sizes = [8, 128], strides = [1, 1]} : vector<8x4096xf32> to vector<8x128xf32>
    %28 = vector.extract_strided_slice %13 {offsets = [0, 1792], sizes = [8, 128], strides = [1, 1]} : vector<8x4096xf32> to vector<8x128xf32>
    %29 = vector.extract_strided_slice %13 {offsets = [0, 1920], sizes = [8, 128], strides = [1, 1]} : vector<8x4096xf32> to vector<8x128xf32>
    %30 = vector.extract_strided_slice %13 {offsets = [0, 2048], sizes = [8, 128], strides = [1, 1]} : vector<8x4096xf32> to vector<8x128xf32>
    %31 = vector.extract_strided_slice %13 {offsets = [0, 2176], sizes = [8, 128], strides = [1, 1]} : vector<8x4096xf32> to vector<8x128xf32>
    %32 = vector.extract_strided_slice %13 {offsets = [0, 2304], sizes = [8, 128], strides = [1, 1]} : vector<8x4096xf32> to vector<8x128xf32>
    %33 = vector.extract_strided_slice %13 {offsets = [0, 2432], sizes = [8, 128], strides = [1, 1]} : vector<8x4096xf32> to vector<8x128xf32>
    %34 = vector.extract_strided_slice %13 {offsets = [0, 2560], sizes = [8, 128], strides = [1, 1]} : vector<8x4096xf32> to vector<8x128xf32>
    %35 = vector.extract_strided_slice %13 {offsets = [0, 2688], sizes = [8, 128], strides = [1, 1]} : vector<8x4096xf32> to vector<8x128xf32>
    %36 = vector.extract_strided_slice %13 {offsets = [0, 2816], sizes = [8, 128], strides = [1, 1]} : vector<8x4096xf32> to vector<8x128xf32>
    %37 = vector.extract_strided_slice %13 {offsets = [0, 2944], sizes = [8, 128], strides = [1, 1]} : vector<8x4096xf32> to vector<8x128xf32>
    %38 = vector.extract_strided_slice %13 {offsets = [0, 3072], sizes = [8, 128], strides = [1, 1]} : vector<8x4096xf32> to vector<8x128xf32>
    %39 = vector.extract_strided_slice %13 {offsets = [0, 3200], sizes = [8, 128], strides = [1, 1]} : vector<8x4096xf32> to vector<8x128xf32>
    %40 = vector.extract_strided_slice %13 {offsets = [0, 3328], sizes = [8, 128], strides = [1, 1]} : vector<8x4096xf32> to vector<8x128xf32>
    %41 = vector.extract_strided_slice %13 {offsets = [0, 3456], sizes = [8, 128], strides = [1, 1]} : vector<8x4096xf32> to vector<8x128xf32>
    %42 = vector.extract_strided_slice %13 {offsets = [0, 3584], sizes = [8, 128], strides = [1, 1]} : vector<8x4096xf32> to vector<8x128xf32>
    %43 = vector.extract_strided_slice %13 {offsets = [0, 3712], sizes = [8, 128], strides = [1, 1]} : vector<8x4096xf32> to vector<8x128xf32>
    %44 = vector.extract_strided_slice %13 {offsets = [0, 3840], sizes = [8, 128], strides = [1, 1]} : vector<8x4096xf32> to vector<8x128xf32>
    %45 = vector.extract_strided_slice %13 {offsets = [0, 3968], sizes = [8, 128], strides = [1, 1]} : vector<8x4096xf32> to vector<8x128xf32>
    %46 = arith.addf %14, %15 : vector<8x128xf32>
    %47 = arith.addf %16, %17 : vector<8x128xf32>
    %48 = arith.addf %18, %19 : vector<8x128xf32>
    %49 = arith.addf %20, %21 : vector<8x128xf32>
    %50 = arith.addf %22, %23 : vector<8x128xf32>
    %51 = arith.addf %24, %25 : vector<8x128xf32>
    %52 = arith.addf %26, %27 : vector<8x128xf32>
    %53 = arith.addf %28, %29 : vector<8x128xf32>
    %54 = arith.addf %30, %31 : vector<8x128xf32>
    %55 = arith.addf %32, %33 : vector<8x128xf32>
    %56 = arith.addf %34, %35 : vector<8x128xf32>
    %57 = arith.addf %36, %37 : vector<8x128xf32>
    %58 = arith.addf %38, %39 : vector<8x128xf32>
    %59 = arith.addf %40, %41 : vector<8x128xf32>
    %60 = arith.addf %42, %43 : vector<8x128xf32>
    %61 = arith.addf %44, %45 : vector<8x128xf32>
    %62 = arith.addf %46, %47 : vector<8x128xf32>
    %63 = arith.addf %48, %49 : vector<8x128xf32>
    %64 = arith.addf %50, %51 : vector<8x128xf32>
    %65 = arith.addf %52, %53 : vector<8x128xf32>
    %66 = arith.addf %54, %55 : vector<8x128xf32>
    %67 = arith.addf %56, %57 : vector<8x128xf32>
    %68 = arith.addf %58, %59 : vector<8x128xf32>
    %69 = arith.addf %60, %61 : vector<8x128xf32>
    %70 = arith.addf %62, %63 : vector<8x128xf32>
    %71 = arith.addf %64, %65 : vector<8x128xf32>
    %72 = arith.addf %66, %67 : vector<8x128xf32>
    %73 = arith.addf %68, %69 : vector<8x128xf32>
    %74 = arith.addf %70, %71 : vector<8x128xf32>
    %75 = arith.addf %72, %73 : vector<8x128xf32>
    %76 = arith.addf %74, %75 : vector<8x128xf32>
    %c0_11 = arith.constant 0 : index
    %c0_12 = arith.constant 0 : index
    %c0_13 = arith.constant 0 : index
    %77 = vector.load %arg6[%c0_11, %c0_12, %c0_13] : memref<1x1x128xf32, #tpu.memory_space<vmem>>, vector<1x1x128xf32>
    %78 = vector.shape_cast %77 : vector<1x1x128xf32> to vector<1x128xf32>
    %79 = vector.broadcast %78 : vector<1x128xf32> to vector<8x128xf32>
    %80 = arith.addf %76, %79 : vector<8x128xf32>
    %c0_14 = arith.constant 0 : index
    %c0_15 = arith.constant 0 : index
    %81 = vector.load %arg7[%c0_14, %c0_15] : memref<8x128xf32, #tpu.memory_space<vmem>>, vector<8x128xf32>
    tpu.vector_store %arg7[%c0_14, %c0_15], %80 {strides = array<i32>} : memref<8x128xf32, #tpu.memory_space<vmem>>, vector<8x128xf32>,
    return
  }
  func.func @transform_0(%arg0: i32, %arg1: i32) -> (i32, i32) {
    %c0_i32 = arith.constant 0 : i32
    %c0_i32_0 = arith.constant 0 : i32
    return %arg0, %c0_i32 : i32, i32
  }
  func.func @transform_1(%arg0: i32, %arg1: i32) -> (i32, i32, i32) {
    %c0_i32 = arith.constant 0 : i32
    %c0_i32_0 = arith.constant 0 : i32
    %c0_i32_1 = arith.constant 0 : i32
    return %arg1, %c0_i32, %c0_i32_0 : i32, i32, i32
  }
  func.func @transform_2(%arg0: i32, %arg1: i32) -> (i32, i32, i32) {
    %c0_i32 = arith.constant 0 : i32
    %c0_i32_0 = arith.constant 0 : i32
    %c0_i32_1 = arith.constant 0 : i32
    return %arg1, %c0_i32, %c0_i32_0 : i32, i32, i32
  }
  func.func @transform_3(%arg0: i32, %arg1: i32) -> (i32, i32, i32) {
    %c0_i32 = arith.constant 0 : i32
    %c0_i32_0 = arith.constant 0 : i32
    %c0_i32_1 = arith.constant 0 : i32
    return %arg1, %c0_i32, %c0_i32_0 : i32, i32, i32
  }
  func.func @transform_4(%arg0: i32, %arg1: i32) -> (i32, i32, i32) {
    %c0_i32 = arith.constant 0 : i32
    %c0_i32_0 = arith.constant 0 : i32
    %c0_i32_1 = arith.constant 0 : i32
    return %arg1, %c0_i32, %c0_i32_0 : i32, i32, i32
  }
  func.func @transform_5(%arg0: i32, %arg1: i32) -> (i32, i32) {
    %c0_i32 = arith.constant 0 : i32
    return %arg0, %arg1 : i32, i32
  }
}

</mosaic_0001>

<llo_original>
// kernel: tpu_custom_call.1
$region0: #{tpu_custom_call.1}
  #allocation0 [shape = 'u32[]', space=smem, size = 0x4, offset = 0x4, fixed_abs, tag = 'smem constant byte address 0x4 - core index']
  #allocation1 [shape = 'u32[72,128]{1,0:T(1,128)}', space=vmem, size = 0x9000, scoped, tag = 'internal scratch']
  %s0 = inlined_call_operand.vmem [shape: f32[8,4], index: 0, kind: input, shape index: {}]
  %s1 = inlined_call_operand.hbm [shape: f32[1,4,4096], index: 1, kind: input, shape index: {}]
  %s2 = inlined_call_operand.hbm [shape: f32[1,1,4096], index: 2, kind: input, shape index: {}]
  %s3 = inlined_call_operand.hbm [shape: f32[1,1,4096], index: 3, kind: input, shape index: {}]
  %s4 = inlined_call_operand.vmem [shape: f32[1,1,128], index: 4, kind: input, shape index: {}]
  %s5 = inlined_call_operand.hbm [shape: f32[8,128], index: 5, kind: output, shape index: {}]
  %s6 = sld [smem:[#allocation0]]
  $region42: #{tpu_custom_call.1} parent=0
    _
  %s8 = ssub.s32 1, %s6
  %s9 = scalar_select 0, %s8, %s6
  $region1: #{tpu_custom_call.1} parent=0
    #allocation2 [shape = 'u8[65536]{0}', space=vmem, size = 0x10000, scoped, tag = 'input window, operand 1, single buffered']
    #allocation3 [shape = 's32[1]{0}', space=sflag, size = 0x4, scoped, tag = 'scoped memory for tpu_custom_call.1']
    #allocation4 [shape = 's32[1]{0}', space=sflag, size = 0x4, scoped, tag = 'scoped memory for tpu_custom_call.1']
    #allocation5 [shape = 'u8[16384]{0}', space=vmem, size = 0x4000, scoped, tag = 'input window, operand 2, single buffered']
    #allocation6 [shape = 's32[1]{0}', space=sflag, size = 0x4, scoped, tag = 'scoped memory for tpu_custom_call.1']
    #allocation7 [shape = 'u8[16384]{0}', space=vmem, size = 0x4000, scoped, tag = 'input window, operand 3, single buffered']
    #allocation8 [shape = 'u8[4096]{0}', space=vmem, size = 0x1000, scoped, tag = 'output window, operand 0, single buffered']
    %10 = vsyncpa [#allocation3], 0
    %11 = vsyncpa [#allocation6], 0
    %12 = vsyncpa [#allocation4], 0
    // Predicated region
    $region2: #{tpu_custom_call.1} parent=1 // pred_check
      _
    $region3: #{tpu_custom_call.1} parent=1 // pred_check_branch
      %14 = sbr.rel (0) target = $region5
    $region4: #{tpu_custom_call.1} parent=1 // pred_region
      _
    $region5: #{tpu_custom_call.1} parent=1 // pred_fallthru
      _
    // Predicated region
    $region6: #{tpu_custom_call.1} parent=1 // pred_check
      _
    $region7: #{tpu_custom_call.1} parent=1 // pred_check_branch
      %16 = sbr.rel (0) target = $region9
    $region8: #{tpu_custom_call.1} parent=1 // pred_region
      %18 = vsyncadd [#allocation3], 0
      %s20 = sshll.u32 %s1, 4
      %s21 = int_to_ptr.hbm [resolvable:$true] %s20
      %s22 = sshll.u32 [#allocation2], 4
      %s23 = int_to_ptr.vmem [resolvable:$true] %s22
      %25 = dma.hbm_to_vmem [thread:$0]  %s21, 2048, %s23, [#allocation3]
    $region9: #{tpu_custom_call.1} parent=1 // pred_fallthru
      _
    // Predicated region
    $region10: #{tpu_custom_call.1} parent=1 // pred_check
      _
    $region11: #{tpu_custom_call.1} parent=1 // pred_check_branch
      %27 = sbr.rel (0) target = $region13
    $region12: #{tpu_custom_call.1} parent=1 // pred_region
      %29 = vsyncadd [#allocation6], 0
      %s31 = sshll.u32 %s2, 4
      %s32 = int_to_ptr.hbm [resolvable:$true] %s31
      %s33 = sshll.u32 [#allocation5], 4
      %s34 = int_to_ptr.vmem [resolvable:$true] %s33
      %36 = dma.hbm_to_vmem [thread:$0]  %s32, 512, %s34, [#allocation6]
    $region13: #{tpu_custom_call.1} parent=1 // pred_fallthru
      _
    // Predicated region
    $region14: #{tpu_custom_call.1} parent=1 // pred_check
      _
    $region15: #{tpu_custom_call.1} parent=1 // pred_check_branch
      %38 = sbr.rel (0) target = $region17
    $region16: #{tpu_custom_call.1} parent=1 // pred_region
      %40 = vsyncadd [#allocation6], 0
      %s42 = sshll.u32 %s3, 4
      %s43 = int_to_ptr.hbm [resolvable:$true] %s42
      %s44 = sshll.u32 [#allocation7], 4
      %s45 = int_to_ptr.vmem [resolvable:$true] %s44
      %47 = dma.hbm_to_vmem [thread:$0]  %s43, 512, %s45, [#allocation6]
    $region17: #{tpu_custom_call.1} parent=1 // pred_fallthru
      _
    // Predicated region
    $region18: #{tpu_custom_call.1} parent=1 // pred_check
      _
    $region19: #{tpu_custom_call.1} parent=1 // pred_check_branch
      %49 = sbr.rel (0) target = $region21
    $region20: #{tpu_custom_call.1} parent=1 // pred_region
      _
    $region21: #{tpu_custom_call.1} parent=1 // pred_fallthru
      _
    // Predicated region
    $region22: #{tpu_custom_call.1} parent=1 // pred_check
      _
    $region23: #{tpu_custom_call.1} parent=1 // pred_check_branch
      %51 = sbr.rel (0) target = $region25
    $region24: #{tpu_custom_call.1} parent=1 // pred_region
      %53 = dma.done [#allocation3], 2048
    $region25: #{tpu_custom_call.1} parent=1 // pred_fallthru
      _
    // Predicated region
    $region26: #{tpu_custom_call.1} parent=1 // pred_check
      _
    $region27: #{tpu_custom_call.1} parent=1 // pred_check_branch
      %55 = sbr.rel (0) target = $region29
    $region28: #{tpu_custom_call.1} parent=1 // pred_region
      %57 = dma.done [#allocation6], 512
    $region29: #{tpu_custom_call.1} parent=1 // pred_fallthru
      _
    // Predicated region
    $region30: #{tpu_custom_call.1} parent=1 // pred_check
      _
    $region31: #{tpu_custom_call.1} parent=1 // pred_check_branch
      %59 = sbr.rel (0) target = $region33
    $region32: #{tpu_custom_call.1} parent=1 // pred_region
      %61 = dma.done [#allocation6], 512
    $region33: #{tpu_custom_call.1} parent=1 // pred_fallthru
      _
    %v62 = vld [vmem:[%s0] sm:$0xff]
    %v63 = vld [vmem:[#allocation2] sm:$0xff]
    %v64 = vld [vmem:[#allocation2 + $0x8] sm:$0xff]
    %v65 = vld [vmem:[#allocation2 + $0x10] sm:$0xff]
    %v66 = vld [vmem:[#allocation2 + $0x18] sm:$0xff]
    %v67 = vld [vmem:[#allocation2 + $0x20] sm:$0xff]
    %v68 = vld [vmem:[#allocation2 + $0x28] sm:$0xff]
    %v69 = vld [vmem:[#allocation2 + $0x30] sm:$0xff]
    %v70 = vld [vmem:[#allocation2 + $0x38] sm:$0xff]
    %v71 = vld [vmem:[#allocation2 + $0x40] sm:$0xff]
    %v72 = vld [vmem:[#allocation2 + $0x48] sm:$0xff]
    %v73 = vld [vmem:[#allocation2 + $0x50] sm:$0xff]
    %v74 = vld [vmem:[#allocation2 + $0x58] sm:$0xff]
    %v75 = vld [vmem:[#allocation2 + $0x60] sm:$0xff]
    %v76 = vld [vmem:[#allocation2 + $0x68] sm:$0xff]
    %v77 = vld [vmem:[#allocation2 + $0x70] sm:$0xff]
    %v78 = vld [vmem:[#allocation2 + $0x78] sm:$0xff]
    %v79 = vld [vmem:[#allocation5] sm:$0xff]
    %v80 = vld [vmem:[#allocation5 + $0x8] sm:$0xff]
    %v81 = vld [vmem:[#allocation5 + $0x10] sm:$0xff]
    %v82 = vld [vmem:[#allocation5 + $0x18] sm:$0xff]
    %v87 = vperm.slane %v79, 0
    %v88 = vperm.slane %v79, 1
    %v89 = vperm.slane %v79, 2
    %v90 = vperm.slane %v79, 3
    %v91 = vperm.slane %v79, 4
    %v92 = vperm.slane %v79, 5
    %v93 = vperm.slane %v79, 6
    %v94 = vperm.slane %v79, 7
    %v95 = vperm.slane %v80, 0
    %v96 = vperm.slane %v80, 1
    %v97 = vperm.slane %v80, 2
    %v98 = vperm.slane %v80, 3
    %v99 = vperm.slane %v80, 4
    %v100 = vperm.slane %v80, 5
    %v101 = vperm.slane %v80, 6
    %v102 = vperm.slane %v80, 7
    %v103 = vperm.slane %v81, 0
    %v104 = vperm.slane %v81, 1
    %v105 = vperm.slane %v81, 2
    %v106 = vperm.slane %v81, 3
    %v107 = vperm.slane %v81, 4
    %v108 = vperm.slane %v81, 5
    %v109 = vperm.slane %v81, 6
    %v110 = vperm.slane %v81, 7
    %v111 = vperm.slane %v82, 0
    %v112 = vperm.slane %v82, 1
    %v113 = vperm.slane %v82, 2
    %v114 = vperm.slane %v82, 3
    %v115 = vperm.slane %v82, 4
    %v116 = vperm.slane %v82, 5
    %v117 = vperm.slane %v82, 6
    %v118 = vperm.slane %v82, 7
    %167 = vst [vmem:[#allocation1] ss:$2 sm:$0xff] %v63
    %s168 = scalar_lea.vmem [#allocation1], 16
    %169 = vst [vmem:[%s168] ss:$2 sm:$0xff] %v64
    %s170 = scalar_lea.vmem [#allocation1], 32
    %171 = vst [vmem:[%s170] ss:$2 sm:$0xff] %v65
    %s172 = scalar_lea.vmem [#allocation1], 48
    %173 = vst [vmem:[%s172] ss:$2 sm:$0xff] %v66
    %v174 = vld.sshfl [vmem:[#allocation1] sm:$0xff pattern:$0x75316420]
    %v175 = vld.sshfl [vmem:[#allocation1 + $0x8] sm:$0xff pattern:$0x75316420]
    %v176 = vld.sshfl [vmem:[#allocation1 + $0x10] sm:$0xff pattern:$0x75316420]
    %v177 = vld.sshfl [vmem:[#allocation1 + $0x18] sm:$0xff pattern:$0x75316420]
    %v178 = vld.sshfl [vmem:[#allocation1 + $0x20] sm:$0xff pattern:$0x75316420]
    %v179 = vld.sshfl [vmem:[#allocation1 + $0x28] sm:$0xff pattern:$0x75316420]
    %v180 = vld.sshfl [vmem:[#allocation1 + $0x30] sm:$0xff pattern:$0x75316420]
    %v181 = vld.sshfl [vmem:[#allocation1 + $0x38] sm:$0xff pattern:$0x75316420]
    %182 = vst [vmem:[#allocation1] ss:$2 sm:$0xff] %v67
    %183 = vst [vmem:[%s168] ss:$2 sm:$0xff] %v68
    %184 = vst [vmem:[%s170] ss:$2 sm:$0xff] %v69
    %185 = vst [vmem:[%s172] ss:$2 sm:$0xff] %v70
    %v186 = vld.sshfl [vmem:[#allocation1] sm:$0xff pattern:$0x75316420]
    %v187 = vld.sshfl [vmem:[#allocation1 + $0x8] sm:$0xff pattern:$0x75316420]
    %v188 = vld.sshfl [vmem:[#allocation1 + $0x10] sm:$0xff pattern:$0x75316420]
    %v189 = vld.sshfl [vmem:[#allocation1 + $0x18] sm:$0xff pattern:$0x75316420]
    %v190 = vld.sshfl [vmem:[#allocation1 + $0x20] sm:$0xff pattern:$0x75316420]
    %v191 = vld.sshfl [vmem:[#allocation1 + $0x28] sm:$0xff pattern:$0x75316420]
    %v192 = vld.sshfl [vmem:[#allocation1 + $0x30] sm:$0xff pattern:$0x75316420]
    %v193 = vld.sshfl [vmem:[#allocation1 + $0x38] sm:$0xff pattern:$0x75316420]
    %194 = vst [vmem:[#allocation1] ss:$2 sm:$0xff] %v71
    %195 = vst [vmem:[%s168] ss:$2 sm:$0xff] %v72
    %196 = vst [vmem:[%s170] ss:$2 sm:$0xff] %v73
    %197 = vst [vmem:[%s172] ss:$2 sm:$0xff] %v74
    %v198 = vld.sshfl [vmem:[#allocation1] sm:$0xff pattern:$0x75316420]
    %v199 = vld.sshfl [vmem:[#allocation1 + $0x8] sm:$0xff pattern:$0x75316420]
    %v200 = vld.sshfl [vmem:[#allocation1 + $0x10] sm:$0xff pattern:$0x75316420]
    %v201 = vld.sshfl [vmem:[#allocation1 + $0x18] sm:$0xff pattern:$0x75316420]
    %v202 = vld.sshfl [vmem:[#allocation1 + $0x20] sm:$0xff pattern:$0x75316420]
    %v203 = vld.sshfl [vmem:[#allocation1 + $0x28] sm:$0xff pattern:$0x75316420]
    %v204 = vld.sshfl [vmem:[#allocation1 + $0x30] sm:$0xff pattern:$0x75316420]
    %v205 = vld.sshfl [vmem:[#allocation1 + $0x38] sm:$0xff pattern:$0x75316420]
    %206 = vst [vmem:[#allocation1] ss:$2 sm:$0xff] %v75
    %207 = vst [vmem:[%s168] ss:$2 sm:$0xff] %v76
    %208 = vst [vmem:[%s170] ss:$2 sm:$0xff] %v77
    %209 = vst [vmem:[%s172] ss:$2 sm:$0xff] %v78
    %v210 = vld.sshfl [vmem:[#allocation1] sm:$0xff pattern:$0x75316420]
    %v211 = vld.sshfl [vmem:[#allocation1 + $0x8] sm:$0xff pattern:$0x75316420]
    %v212 = vld.sshfl [vmem:[#allocation1 + $0x10] sm:$0xff pattern:$0x75316420]
    %v213 = vld.sshfl [vmem:[#allocation1 + $0x18] sm:$0xff pattern:$0x75316420]
    %v214 = vld.sshfl [vmem:[#allocation1 + $0x20] sm:$0xff pattern:$0x75316420]
    %v215 = vld.sshfl [vmem:[#allocation1 + $0x28] sm:$0xff pattern:$0x75316420]
    %v216 = vld.sshfl [vmem:[#allocation1 + $0x30] sm:$0xff pattern:$0x75316420]
    %v217 = vld.sshfl [vmem:[#allocation1 + $0x38] sm:$0xff pattern:$0x75316420]
    %vm218 = vcmask 31744
    %v220 = vsel %vm218, %v62, 0
    %vm222 = vcmask 1043456
    %v223 = vsel %vm222, %v174, 0
    %v225 = vsel %vm222, %v175, 0
    %v227 = vsel %vm222, %v176, 0
    %v229 = vsel %vm222, %v177, 0
    %v231 = vsel %vm222, %v178, 0
    %v233 = vsel %vm222, %v179, 0
    %v235 = vsel %vm222, %v180, 0
    %v237 = vsel %vm222, %v181, 0
    %v239 = vsel %vm222, %v186, 0
    %v241 = vsel %vm222, %v187, 0
    %v243 = vsel %vm222, %v188, 0
    %v245 = vsel %vm222, %v189, 0
    %v247 = vsel %vm222, %v190, 0
    %v249 = vsel %vm222, %v191, 0
    %v251 = vsel %vm222, %v192, 0
    %v253 = vsel %vm222, %v193, 0
    %v255 = vsel %vm222, %v198, 0
    %v257 = vsel %vm222, %v199, 0
    %v259 = vsel %vm222, %v200, 0
    %v261 = vsel %vm222, %v201, 0
    %v263 = vsel %vm222, %v202, 0
    %v265 = vsel %vm222, %v203, 0
    %v267 = vsel %vm222, %v204, 0
    %v269 = vsel %vm222, %v205, 0
    %v271 = vsel %vm222, %v210, 0
    %v273 = vsel %vm222, %v211, 0
    %v275 = vsel %vm222, %v212, 0
    %v277 = vsel %vm222, %v213, 0
    %v279 = vsel %vm222, %v214, 0
    %v281 = vsel %vm222, %v215, 0
    %v283 = vsel %vm222, %v216, 0
    %v285 = vsel %vm222, %v217, 0
    %287 = vmatpush.msra.mxu0 0.0
    %288 = vmatpush.msra.mxu0 0.0
    %289 = vmatpush.msra.mxu0 0.0
    %290 = vmatpush.msra.mxu0 0.0
    %291 = vmatpush.msra.mxu0 0.0
    %292 = vmatpush.msra.mxu0 0.0
    %293 = vmatpush.msra.mxu0 0.0
    %294 = vmatpush.msra.mxu0 0.0
    %295 = vmatpush.msra.mxu0 0.0
    %296 = vmatpush.msra.mxu0 0.0
    %297 = vmatpush.msra.mxu0 0.0
    %298 = vmatpush.msra.mxu0 0.0
    %299 = vmatpush.msra.mxu0 0.0
    %300 = vmatpush.msra.mxu0 0.0
    %301 = vmatpush.msra.mxu0 0.0
    %302 = vmatpush.msra.mxu0 %v223
    %303 = vmatmul.f32.gmra.mxu0 %v220
    %v304 = vpop.f32.mrf.mxu0
    %v305 = vadd.f32 %v87, %v304
    %306 = vdwg.mxu0
    %307 = vmatpush.msra.mxu0 0.0
    %308 = vmatpush.msra.mxu0 0.0
    %309 = vmatpush.msra.mxu0 0.0
    %310 = vmatpush.msra.mxu0 0.0
    %311 = vmatpush.msra.mxu0 0.0
    %312 = vmatpush.msra.mxu0 0.0
    %313 = vmatpush.msra.mxu0 0.0
    %314 = vmatpush.msra.mxu0 0.0
    %315 = vmatpush.msra.mxu0 0.0
    %316 = vmatpush.msra.mxu0 0.0
    %317 = vmatpush.msra.mxu0 0.0
    %318 = vmatpush.msra.mxu0 0.0
    %319 = vmatpush.msra.mxu0 0.0
    %320 = vmatpush.msra.mxu0 0.0
    %321 = vmatpush.msra.mxu0 0.0
    %322 = vmatpush.msra.mxu0 %v225
    %323 = vmatmul.f32.gmra.mxu0 %v220
    %v324 = vpop.f32.mrf.mxu0
    %v325 = vadd.f32 %v88, %v324
    %326 = vdwg.mxu0
    %327 = vmatpush.msra.mxu0 0.0
    %328 = vmatpush.msra.mxu0 0.0
    %329 = vmatpush.msra.mxu0 0.0
    %330 = vmatpush.msra.mxu0 0.0
    %331 = vmatpush.msra.mxu0 0.0
    %332 = vmatpush.msra.mxu0 0.0
    %333 = vmatpush.msra.mxu0 0.0
    %334 = vmatpush.msra.mxu0 0.0
    %335 = vmatpush.msra.mxu0 0.0
    %336 = vmatpush.msra.mxu0 0.0
    %337 = vmatpush.msra.mxu0 0.0
    %338 = vmatpush.msra.mxu0 0.0
    %339 = vmatpush.msra.mxu0 0.0
    %340 = vmatpush.msra.mxu0 0.0
    %341 = vmatpush.msra.mxu0 0.0
    %342 = vmatpush.msra.mxu0 %v227
    %343 = vmatmul.f32.gmra.mxu0 %v220
    %v344 = vpop.f32.mrf.mxu0
    %v345 = vadd.f32 %v89, %v344
    %346 = vdwg.mxu0
    %347 = vmatpush.msra.mxu0 0.0
    %348 = vmatpush.msra.mxu0 0.0
    %349 = vmatpush.msra.mxu0 0.0
    %350 = vmatpush.msra.mxu0 0.0
    %351 = vmatpush.msra.mxu0 0.0
    %352 = vmatpush.msra.mxu0 0.0
    %353 = vmatpush.msra.mxu0 0.0
    %354 = vmatpush.msra.mxu0 0.0
    %355 = vmatpush.msra.mxu0 0.0
    %356 = vmatpush.msra.mxu0 0.0
    %357 = vmatpush.msra.mxu0 0.0
    %358 = vmatpush.msra.mxu0 0.0
    %359 = vmatpush.msra.mxu0 0.0
    %360 = vmatpush.msra.mxu0 0.0
    %361 = vmatpush.msra.mxu0 0.0
    %362 = vmatpush.msra.mxu0 %v229
    %363 = vmatmul.f32.gmra.mxu0 %v220
    %v364 = vpop.f32.mrf.mxu0
    %v365 = vadd.f32 %v90, %v364
    %366 = vdwg.mxu0
    %367 = vmatpush.msra.mxu0 0.0
    %368 = vmatpush.msra.mxu0 0.0
    %369 = vmatpush.msra.mxu0 0.0
    %370 = vmatpush.msra.mxu0 0.0
    %371 = vmatpush.msra.mxu0 0.0
    %372 = vmatpush.msra.mxu0 0.0
    %373 = vmatpush.msra.mxu0 0.0
    %374 = vmatpush.msra.mxu0 0.0
    %375 = vmatpush.msra.mxu0 0.0
    %376 = vmatpush.msra.mxu0 0.0
    %377 = vmatpush.msra.mxu0 0.0
    %378 = vmatpush.msra.mxu0 0.0
    %379 = vmatpush.msra.mxu0 0.0
    %380 = vmatpush.msra.mxu0 0.0
    %381 = vmatpush.msra.mxu0 0.0
    %382 = vmatpush.msra.mxu0 %v231
    %383 = vmatmul.f32.gmra.mxu0 %v220
    %v384 = vpop.f32.mrf.mxu0
    %v385 = vadd.f32 %v91, %v384
    %386 = vdwg.mxu0
    %387 = vmatpush.msra.mxu0 0.0
    %388 = vmatpush.msra.mxu0 0.0
    %389 = vmatpush.msra.mxu0 0.0
    %390 = vmatpush.msra.mxu0 0.0
    %391 = vmatpush.msra.mxu0 0.0
    %392 = vmatpush.msra.mxu0 0.0
    %393 = vmatpush.msra.mxu0 0.0
    %394 = vmatpush.msra.mxu0 0.0
    %395 = vmatpush.msra.mxu0 0.0
    %396 = vmatpush.msra.mxu0 0.0
    %397 = vmatpush.msra.mxu0 0.0
    %398 = vmatpush.msra.mxu0 0.0
    %399 = vmatpush.msra.mxu0 0.0
    %400 = vmatpush.msra.mxu0 0.0
    %401 = vmatpush.msra.mxu0 0.0
    %402 = vmatpush.msra.mxu0 %v233
    %403 = vmatmul.f32.gmra.mxu0 %v220
    %v404 = vpop.f32.mrf.mxu0
    %v405 = vadd.f32 %v92, %v404
    %406 = vdwg.mxu0
    %407 = vmatpush.msra.mxu0 0.0
    %408 = vmatpush.msra.mxu0 0.0
    %409 = vmatpush.msra.mxu0 0.0
    %410 = vmatpush.msra.mxu0 0.0
    %411 = vmatpush.msra.mxu0 0.0
    %412 = vmatpush.msra.mxu0 0.0
    %413 = vmatpush.msra.mxu0 0.0
    %414 = vmatpush.msra.mxu0 0.0
    %415 = vmatpush.msra.mxu0 0.0
    %416 = vmatpush.msra.mxu0 0.0
    %417 = vmatpush.msra.mxu0 0.0
    %418 = vmatpush.msra.mxu0 0.0
    %419 = vmatpush.msra.mxu0 0.0
    %420 = vmatpush.msra.mxu0 0.0
    %421 = vmatpush.msra.mxu0 0.0
    %422 = vmatpush.msra.mxu0 %v235
    %423 = vmatmul.f32.gmra.mxu0 %v220
    %v424 = vpop.f32.mrf.mxu0
    %v425 = vadd.f32 %v93, %v424
    %426 = vdwg.mxu0
    %427 = vmatpush.msra.mxu0 0.0
    %428 = vmatpush.msra.mxu0 0.0
    %429 = vmatpush.msra.mxu0 0.0
    %430 = vmatpush.msra.mxu0 0.0
    %431 = vmatpush.msra.mxu0 0.0
    %432 = vmatpush.msra.mxu0 0.0
    %433 = vmatpush.msra.mxu0 0.0
    %434 = vmatpush.msra.mxu0 0.0
    %435 = vmatpush.msra.mxu0 0.0
    %436 = vmatpush.msra.mxu0 0.0
    %437 = vmatpush.msra.mxu0 0.0
    %438 = vmatpush.msra.mxu0 0.0
    %439 = vmatpush.msra.mxu0 0.0
    %440 = vmatpush.msra.mxu0 0.0
    %441 = vmatpush.msra.mxu0 0.0
    %442 = vmatpush.msra.mxu0 %v237
    %443 = vmatmul.f32.gmra.mxu0 %v220
    %v444 = vpop.f32.mrf.mxu0
    %v445 = vadd.f32 %v94, %v444
    %446 = vdwg.mxu0
    %447 = vmatpush.msra.mxu0 0.0
    %448 = vmatpush.msra.mxu0 0.0
    %449 = vmatpush.msra.mxu0 0.0
    %450 = vmatpush.msra.mxu0 0.0
    %451 = vmatpush.msra.mxu0 0.0
    %452 = vmatpush.msra.mxu0 0.0
    %453 = vmatpush.msra.mxu0 0.0
    %454 = vmatpush.msra.mxu0 0.0
    %455 = vmatpush.msra.mxu0 0.0
    %456 = vmatpush.msra.mxu0 0.0
    %457 = vmatpush.msra.mxu0 0.0
    %458 = vmatpush.msra.mxu0 0.0
    %459 = vmatpush.msra.mxu0 0.0
    %460 = vmatpush.msra.mxu0 0.0
    %461 = vmatpush.msra.mxu0 0.0
    %462 = vmatpush.msra.mxu0 %v239
    %463 = vmatmul.f32.gmra.mxu0 %v220
    %v464 = vpop.f32.mrf.mxu0
    %v465 = vadd.f32 %v95, %v464
    %466 = vdwg.mxu0
    %467 = vmatpush.msra.mxu0 0.0
    %468 = vmatpush.msra.mxu0 0.0
    %469 = vmatpush.msra.mxu0 0.0
    %470 = vmatpush.msra.mxu0 0.0
    %471 = vmatpush.msra.mxu0 0.0
    %472 = vmatpush.msra.mxu0 0.0
    %473 = vmatpush.msra.mxu0 0.0
    %474 = vmatpush.msra.mxu0 0.0
    %475 = vmatpush.msra.mxu0 0.0
    %476 = vmatpush.msra.mxu0 0.0
    %477 = vmatpush.msra.mxu0 0.0
    %478 = vmatpush.msra.mxu0 0.0
    %479 = vmatpush.msra.mxu0 0.0
    %480 = vmatpush.msra.mxu0 0.0
    %481 = vmatpush.msra.mxu0 0.0
    %482 = vmatpush.msra.mxu0 %v241
    %483 = vmatmul.f32.gmra.mxu0 %v220
    %v484 = vpop.f32.mrf.mxu0
    %v485 = vadd.f32 %v96, %v484
    %486 = vdwg.mxu0
    %487 = vmatpush.msra.mxu0 0.0
    %488 = vmatpush.msra.mxu0 0.0
    %489 = vmatpush.msra.mxu0 0.0
    %490 = vmatpush.msra.mxu0 0.0
    %491 = vmatpush.msra.mxu0 0.0
    %492 = vmatpush.msra.mxu0 0.0
    %493 = vmatpush.msra.mxu0 0.0
    %494 = vmatpush.msra.mxu0 0.0
    %495 = vmatpush.msra.mxu0 0.0
    %496 = vmatpush.msra.mxu0 0.0
    %497 = vmatpush.msra.mxu0 0.0
    %498 = vmatpush.msra.mxu0 0.0
    %499 = vmatpush.msra.mxu0 0.0
    %500 = vmatpush.msra.mxu0 0.0
    %501 = vmatpush.msra.mxu0 0.0
    %502 = vmatpush.msra.mxu0 %v243
    %503 = vmatmul.f32.gmra.mxu0 %v220
    %v504 = vpop.f32.mrf.mxu0
    %v505 = vadd.f32 %v97, %v504
    %506 = vdwg.mxu0
    %507 = vmatpush.msra.mxu0 0.0
    %508 = vmatpush.msra.mxu0 0.0
    %509 = vmatpush.msra.mxu0 0.0
    %510 = vmatpush.msra.mxu0 0.0
    %511 = vmatpush.msra.mxu0 0.0
    %512 = vmatpush.msra.mxu0 0.0
    %513 = vmatpush.msra.mxu0 0.0
    %514 = vmatpush.msra.mxu0 0.0
    %515 = vmatpush.msra.mxu0 0.0
    %516 = vmatpush.msra.mxu0 0.0
    %517 = vmatpush.msra.mxu0 0.0
    %518 = vmatpush.msra.mxu0 0.0
    %519 = vmatpush.msra.mxu0 0.0
    %520 = vmatpush.msra.mxu0 0.0
    %521 = vmatpush.msra.mxu0 0.0
    %522 = vmatpush.msra.mxu0 %v245
    %523 = vmatmul.f32.gmra.mxu0 %v220
    %v524 = vpop.f32.mrf.mxu0
    %v525 = vadd.f32 %v98, %v524
    %526 = vdwg.mxu0
    %527 = vmatpush.msra.mxu0 0.0
    %528 = vmatpush.msra.mxu0 0.0
    %529 = vmatpush.msra.mxu0 0.0
    %530 = vmatpush.msra.mxu0 0.0
    %531 = vmatpush.msra.mxu0 0.0
    %532 = vmatpush.msra.mxu0 0.0
    %533 = vmatpush.msra.mxu0 0.0
    %534 = vmatpush.msra.mxu0 0.0
    %535 = vmatpush.msra.mxu0 0.0
    %536 = vmatpush.msra.mxu0 0.0
    %537 = vmatpush.msra.mxu0 0.0
    %538 = vmatpush.msra.mxu0 0.0
    %539 = vmatpush.msra.mxu0 0.0
    %540 = vmatpush.msra.mxu0 0.0
    %541 = vmatpush.msra.mxu0 0.0
    %542 = vmatpush.msra.mxu0 %v247
    %543 = vmatmul.f32.gmra.mxu0 %v220
    %v544 = vpop.f32.mrf.mxu0
    %v545 = vadd.f32 %v99, %v544
    %546 = vdwg.mxu0
    %547 = vmatpush.msra.mxu0 0.0
    %548 = vmatpush.msra.mxu0 0.0
    %549 = vmatpush.msra.mxu0 0.0
    %550 = vmatpush.msra.mxu0 0.0
    %551 = vmatpush.msra.mxu0 0.0
    %552 = vmatpush.msra.mxu0 0.0
    %553 = vmatpush.msra.mxu0 0.0
    %554 = vmatpush.msra.mxu0 0.0
    %555 = vmatpush.msra.mxu0 0.0
    %556 = vmatpush.msra.mxu0 0.0
    %557 = vmatpush.msra.mxu0 0.0
    %558 = vmatpush.msra.mxu0 0.0
    %559 = vmatpush.msra.mxu0 0.0
    %560 = vmatpush.msra.mxu0 0.0
    %561 = vmatpush.msra.mxu0 0.0
    %562 = vmatpush.msra.mxu0 %v249
    %563 = vmatmul.f32.gmra.mxu0 %v220
    %v564 = vpop.f32.mrf.mxu0
    %v565 = vadd.f32 %v100, %v564
    %566 = vdwg.mxu0
    %567 = vmatpush.msra.mxu0 0.0
    %568 = vmatpush.msra.mxu0 0.0
    %569 = vmatpush.msra.mxu0 0.0
    %570 = vmatpush.msra.mxu0 0.0
    %571 = vmatpush.msra.mxu0 0.0
    %572 = vmatpush.msra.mxu0 0.0
    %573 = vmatpush.msra.mxu0 0.0
    %574 = vmatpush.msra.mxu0 0.0
    %575 = vmatpush.msra.mxu0 0.0
    %576 = vmatpush.msra.mxu0 0.0
    %577 = vmatpush.msra.mxu0 0.0
    %578 = vmatpush.msra.mxu0 0.0
    %579 = vmatpush.msra.mxu0 0.0
    %580 = vmatpush.msra.mxu0 0.0
    %581 = vmatpush.msra.mxu0 0.0
    %582 = vmatpush.msra.mxu0 %v251
    %583 = vmatmul.f32.gmra.mxu0 %v220
    %v584 = vpop.f32.mrf.mxu0
    %v585 = vadd.f32 %v101, %v584
    %586 = vdwg.mxu0
    %587 = vmatpush.msra.mxu0 0.0
    %588 = vmatpush.msra.mxu0 0.0
    %589 = vmatpush.msra.mxu0 0.0
    %590 = vmatpush.msra.mxu0 0.0
    %591 = vmatpush.msra.mxu0 0.0
    %592 = vmatpush.msra.mxu0 0.0
    %593 = vmatpush.msra.mxu0 0.0
    %594 = vmatpush.msra.mxu0 0.0
    %595 = vmatpush.msra.mxu0 0.0
    %596 = vmatpush.msra.mxu0 0.0
    %597 = vmatpush.msra.mxu0 0.0
    %598 = vmatpush.msra.mxu0 0.0
    %599 = vmatpush.msra.mxu0 0.0
    %600 = vmatpush.msra.mxu0 0.0
    %601 = vmatpush.msra.mxu0 0.0
    %602 = vmatpush.msra.mxu0 %v253
    %603 = vmatmul.f32.gmra.mxu0 %v220
    %v604 = vpop.f32.mrf.mxu0
    %v605 = vadd.f32 %v102, %v604
    %606 = vdwg.mxu0
    %607 = vmatpush.msra.mxu0 0.0
    %608 = vmatpush.msra.mxu0 0.0
    %609 = vmatpush.msra.mxu0 0.0
    %610 = vmatpush.msra.mxu0 0.0
    %611 = vmatpush.msra.mxu0 0.0
    %612 = vmatpush.msra.mxu0 0.0
    %613 = vmatpush.msra.mxu0 0.0
    %614 = vmatpush.msra.mxu0 0.0
    %615 = vmatpush.msra.mxu0 0.0
    %616 = vmatpush.msra.mxu0 0.0
    %617 = vmatpush.msra.mxu0 0.0
    %618 = vmatpush.msra.mxu0 0.0
    %619 = vmatpush.msra.mxu0 0.0
    %620 = vmatpush.msra.mxu0 0.0
    %621 = vmatpush.msra.mxu0 0.0
    %622 = vmatpush.msra.mxu0 %v255
    %623 = vmatmul.f32.gmra.mxu0 %v220
    %v624 = vpop.f32.mrf.mxu0
    %v625 = vadd.f32 %v103, %v624
    %626 = vdwg.mxu0
    %627 = vmatpush.msra.mxu0 0.0
    %628 = vmatpush.msra.mxu0 0.0
    %629 = vmatpush.msra.mxu0 0.0
    %630 = vmatpush.msra.mxu0 0.0
    %631 = vmatpush.msra.mxu0 0.0
    %632 = vmatpush.msra.mxu0 0.0
    %633 = vmatpush.msra.mxu0 0.0
    %634 = vmatpush.msra.mxu0 0.0
    %635 = vmatpush.msra.mxu0 0.0
    %636 = vmatpush.msra.mxu0 0.0
    %637 = vmatpush.msra.mxu0 0.0
    %638 = vmatpush.msra.mxu0 0.0
    %639 = vmatpush.msra.mxu0 0.0
    %640 = vmatpush.msra.mxu0 0.0
    %641 = vmatpush.msra.mxu0 0.0
    %642 = vmatpush.msra.mxu0 %v257
    %643 = vmatmul.f32.gmra.mxu0 %v220
    %v644 = vpop.f32.mrf.mxu0
    %v645 = vadd.f32 %v104, %v644
    %646 = vdwg.mxu0
    %647 = vmatpush.msra.mxu0 0.0
    %648 = vmatpush.msra.mxu0 0.0
    %649 = vmatpush.msra.mxu0 0.0
    %650 = vmatpush.msra.mxu0 0.0
    %651 = vmatpush.msra.mxu0 0.0
    %652 = vmatpush.msra.mxu0 0.0
    %653 = vmatpush.msra.mxu0 0.0
    %654 = vmatpush.msra.mxu0 0.0
    %655 = vmatpush.msra.mxu0 0.0
    %656 = vmatpush.msra.mxu0 0.0
    %657 = vmatpush.msra.mxu0 0.0
    %658 = vmatpush.msra.mxu0 0.0
    %659 = vmatpush.msra.mxu0 0.0
    %660 = vmatpush.msra.mxu0 0.0
    %661 = vmatpush.msra.mxu0 0.0
    %662 = vmatpush.msra.mxu0 %v259
    %663 = vmatmul.f32.gmra.mxu0 %v220
    %v664 = vpop.f32.mrf.mxu0
    %v665 = vadd.f32 %v105, %v664
    %666 = vdwg.mxu0
    %667 = vmatpush.msra.mxu0 0.0
    %668 = vmatpush.msra.mxu0 0.0
    %669 = vmatpush.msra.mxu0 0.0
    %670 = vmatpush.msra.mxu0 0.0
    %671 = vmatpush.msra.mxu0 0.0
    %672 = vmatpush.msra.mxu0 0.0
    %673 = vmatpush.msra.mxu0 0.0
    %674 = vmatpush.msra.mxu0 0.0
    %675 = vmatpush.msra.mxu0 0.0
    %676 = vmatpush.msra.mxu0 0.0
    %677 = vmatpush.msra.mxu0 0.0
    %678 = vmatpush.msra.mxu0 0.0
    %679 = vmatpush.msra.mxu0 0.0
    %680 = vmatpush.msra.mxu0 0.0
    %681 = vmatpush.msra.mxu0 0.0
    %682 = vmatpush.msra.mxu0 %v261
    %683 = vmatmul.f32.gmra.mxu0 %v220
    %v684 = vpop.f32.mrf.mxu0
    %v685 = vadd.f32 %v106, %v684
    %686 = vdwg.mxu0
    %687 = vmatpush.msra.mxu0 0.0
    %688 = vmatpush.msra.mxu0 0.0
    %689 = vmatpush.msra.mxu0 0.0
    %690 = vmatpush.msra.mxu0 0.0
    %691 = vmatpush.msra.mxu0 0.0
    %692 = vmatpush.msra.mxu0 0.0
    %693 = vmatpush.msra.mxu0 0.0
    %694 = vmatpush.msra.mxu0 0.0
    %695 = vmatpush.msra.mxu0 0.0
    %696 = vmatpush.msra.mxu0 0.0
    %697 = vmatpush.msra.mxu0 0.0
    %698 = vmatpush.msra.mxu0 0.0
    %699 = vmatpush.msra.mxu0 0.0
    %700 = vmatpush.msra.mxu0 0.0
    %701 = vmatpush.msra.mxu0 0.0
    %702 = vmatpush.msra.mxu0 %v263
    %703 = vmatmul.f32.gmra.mxu0 %v220
    %v704 = vpop.f32.mrf.mxu0
    %v705 = vadd.f32 %v107, %v704
    %706 = vdwg.mxu0
    %707 = vmatpush.msra.mxu0 0.0
    %708 = vmatpush.msra.mxu0 0.0
    %709 = vmatpush.msra.mxu0 0.0
    %710 = vmatpush.msra.mxu0 0.0
    %711 = vmatpush.msra.mxu0 0.0
    %712 = vmatpush.msra.mxu0 0.0
    %713 = vmatpush.msra.mxu0 0.0
    %714 = vmatpush.msra.mxu0 0.0
    %715 = vmatpush.msra.mxu0 0.0
    %716 = vmatpush.msra.mxu0 0.0
    %717 = vmatpush.msra.mxu0 0.0
    %718 = vmatpush.msra.mxu0 0.0
    %719 = vmatpush.msra.mxu0 0.0
    %720 = vmatpush.msra.mxu0 0.0
    %721 = vmatpush.msra.mxu0 0.0
    %722 = vmatpush.msra.mxu0 %v265
    %723 = vmatmul.f32.gmra.mxu0 %v220
    %v724 = vpop.f32.mrf.mxu0
    %v725 = vadd.f32 %v108, %v724
    %726 = vdwg.mxu0
    %727 = vmatpush.msra.mxu0 0.0
    %728 = vmatpush.msra.mxu0 0.0
    %729 = vmatpush.msra.mxu0 0.0
    %730 = vmatpush.msra.mxu0 0.0
    %731 = vmatpush.msra.mxu0 0.0
    %732 = vmatpush.msra.mxu0 0.0
    %733 = vmatpush.msra.mxu0 0.0
    %734 = vmatpush.msra.mxu0 0.0
    %735 = vmatpush.msra.mxu0 0.0
    %736 = vmatpush.msra.mxu0 0.0
    %737 = vmatpush.msra.mxu0 0.0
    %738 = vmatpush.msra.mxu0 0.0
    %739 = vmatpush.msra.mxu0 0.0
    %740 = vmatpush.msra.mxu0 0.0
    %741 = vmatpush.msra.mxu0 0.0
    %742 = vmatpush.msra.mxu0 %v267
    %743 = vmatmul.f32.gmra.mxu0 %v220
    %v744 = vpop.f32.mrf.mxu0
    %v745 = vadd.f32 %v109, %v744
    %746 = vdwg.mxu0
    %747 = vmatpush.msra.mxu0 0.0
    %748 = vmatpush.msra.mxu0 0.0
    %749 = vmatpush.msra.mxu0 0.0
    %750 = vmatpush.msra.mxu0 0.0
    %751 = vmatpush.msra.mxu0 0.0
    %752 = vmatpush.msra.mxu0 0.0
    %753 = vmatpush.msra.mxu0 0.0
    %754 = vmatpush.msra.mxu0 0.0
    %755 = vmatpush.msra.mxu0 0.0
    %756 = vmatpush.msra.mxu0 0.0
    %757 = vmatpush.msra.mxu0 0.0
    %758 = vmatpush.msra.mxu0 0.0
    %759 = vmatpush.msra.mxu0 0.0
    %760 = vmatpush.msra.mxu0 0.0
    %761 = vmatpush.msra.mxu0 0.0
    %762 = vmatpush.msra.mxu0 %v269
    %763 = vmatmul.f32.gmra.mxu0 %v220
    %v764 = vpop.f32.mrf.mxu0
    %v765 = vadd.f32 %v110, %v764
    %766 = vdwg.mxu0
    %767 = vmatpush.msra.mxu0 0.0
    %768 = vmatpush.msra.mxu0 0.0
    %769 = vmatpush.msra.mxu0 0.0
    %770 = vmatpush.msra.mxu0 0.0
    %771 = vmatpush.msra.mxu0 0.0
    %772 = vmatpush.msra.mxu0 0.0
    %773 = vmatpush.msra.mxu0 0.0
    %774 = vmatpush.msra.mxu0 0.0
    %775 = vmatpush.msra.mxu0 0.0
    %776 = vmatpush.msra.mxu0 0.0
    %777 = vmatpush.msra.mxu0 0.0
    %778 = vmatpush.msra.mxu0 0.0
    %779 = vmatpush.msra.mxu0 0.0
    %780 = vmatpush.msra.mxu0 0.0
    %781 = vmatpush.msra.mxu0 0.0
    %782 = vmatpush.msra.mxu0 %v271
    %783 = vmatmul.f32.gmra.mxu0 %v220
    %v784 = vpop.f32.mrf.mxu0
    %v785 = vadd.f32 %v111, %v784
    %786 = vdwg.mxu0
    %787 = vmatpush.msra.mxu0 0.0
    %788 = vmatpush.msra.mxu0 0.0
    %789 = vmatpush.msra.mxu0 0.0
    %790 = vmatpush.msra.mxu0 0.0
    %791 = vmatpush.msra.mxu0 0.0
    %792 = vmatpush.msra.mxu0 0.0
    %793 = vmatpush.msra.mxu0 0.0
    %794 = vmatpush.msra.mxu0 0.0
    %795 = vmatpush.msra.mxu0 0.0
    %796 = vmatpush.msra.mxu0 0.0
    %797 = vmatpush.msra.mxu0 0.0
    %798 = vmatpush.msra.mxu0 0.0
    %799 = vmatpush.msra.mxu0 0.0
    %800 = vmatpush.msra.mxu0 0.0
    %801 = vmatpush.msra.mxu0 0.0
    %802 = vmatpush.msra.mxu0 %v273
    %803 = vmatmul.f32.gmra.mxu0 %v220
    %v804 = vpop.f32.mrf.mxu0
    %v805 = vadd.f32 %v112, %v804
    %806 = vdwg.mxu0
    %807 = vmatpush.msra.mxu0 0.0
    %808 = vmatpush.msra.mxu0 0.0
    %809 = vmatpush.msra.mxu0 0.0
    %810 = vmatpush.msra.mxu0 0.0
    %811 = vmatpush.msra.mxu0 0.0
    %812 = vmatpush.msra.mxu0 0.0
    %813 = vmatpush.msra.mxu0 0.0
    %814 = vmatpush.msra.mxu0 0.0
    %815 = vmatpush.msra.mxu0 0.0
    %816 = vmatpush.msra.mxu0 0.0
    %817 = vmatpush.msra.mxu0 0.0
    %818 = vmatpush.msra.mxu0 0.0
    %819 = vmatpush.msra.mxu0 0.0
    %820 = vmatpush.msra.mxu0 0.0
    %821 = vmatpush.msra.mxu0 0.0
    %822 = vmatpush.msra.mxu0 %v275
    %823 = vmatmul.f32.gmra.mxu0 %v220
    %v824 = vpop.f32.mrf.mxu0
    %v825 = vadd.f32 %v113, %v824
    %826 = vdwg.mxu0
    %827 = vmatpush.msra.mxu0 0.0
    %828 = vmatpush.msra.mxu0 0.0
    %829 = vmatpush.msra.mxu0 0.0
    %830 = vmatpush.msra.mxu0 0.0
    %831 = vmatpush.msra.mxu0 0.0
    %832 = vmatpush.msra.mxu0 0.0
    %833 = vmatpush.msra.mxu0 0.0
    %834 = vmatpush.msra.mxu0 0.0
    %835 = vmatpush.msra.mxu0 0.0
    %836 = vmatpush.msra.mxu0 0.0
    %837 = vmatpush.msra.mxu0 0.0
    %838 = vmatpush.msra.mxu0 0.0
    %839 = vmatpush.msra.mxu0 0.0
    %840 = vmatpush.msra.mxu0 0.0
    %841 = vmatpush.msra.mxu0 0.0
    %842 = vmatpush.msra.mxu0 %v277
    %843 = vmatmul.f32.gmra.mxu0 %v220
    %v844 = vpop.f32.mrf.mxu0
    %v845 = vadd.f32 %v114, %v844
    %846 = vdwg.mxu0
    %847 = vmatpush.msra.mxu0 0.0
    %848 = vmatpush.msra.mxu0 0.0
    %849 = vmatpush.msra.mxu0 0.0
    %850 = vmatpush.msra.mxu0 0.0
    %851 = vmatpush.msra.mxu0 0.0
    %852 = vmatpush.msra.mxu0 0.0
    %853 = vmatpush.msra.mxu0 0.0
    %854 = vmatpush.msra.mxu0 0.0
    %855 = vmatpush.msra.mxu0 0.0
    %856 = vmatpush.msra.mxu0 0.0
    %857 = vmatpush.msra.mxu0 0.0
    %858 = vmatpush.msra.mxu0 0.0
    %859 = vmatpush.msra.mxu0 0.0
    %860 = vmatpush.msra.mxu0 0.0
    %861 = vmatpush.msra.mxu0 0.0
    %862 = vmatpush.msra.mxu0 %v279
    %863 = vmatmul.f32.gmra.mxu0 %v220
    %v864 = vpop.f32.mrf.mxu0
    %v865 = vadd.f32 %v115, %v864
    %866 = vdwg.mxu0
    %867 = vmatpush.msra.mxu0 0.0
    %868 = vmatpush.msra.mxu0 0.0
    %869 = vmatpush.msra.mxu0 0.0
    %870 = vmatpush.msra.mxu0 0.0
    %871 = vmatpush.msra.mxu0 0.0
    %872 = vmatpush.msra.mxu0 0.0
    %873 = vmatpush.msra.mxu0 0.0
    %874 = vmatpush.msra.mxu0 0.0
    %875 = vmatpush.msra.mxu0 0.0
    %876 = vmatpush.msra.mxu0 0.0
    %877 = vmatpush.msra.mxu0 0.0
    %878 = vmatpush.msra.mxu0 0.0
    %879 = vmatpush.msra.mxu0 0.0
    %880 = vmatpush.msra.mxu0 0.0
    %881 = vmatpush.msra.mxu0 0.0
    %882 = vmatpush.msra.mxu0 %v281
    %883 = vmatmul.f32.gmra.mxu0 %v220
    %v884 = vpop.f32.mrf.mxu0
    %v885 = vadd.f32 %v116, %v884
    %886 = vdwg.mxu0
    %887 = vmatpush.msra.mxu0 0.0
    %888 = vmatpush.msra.mxu0 0.0
    %889 = vmatpush.msra.mxu0 0.0
    %890 = vmatpush.msra.mxu0 0.0
    %891 = vmatpush.msra.mxu0 0.0
    %892 = vmatpush.msra.mxu0 0.0
    %893 = vmatpush.msra.mxu0 0.0
    %894 = vmatpush.msra.mxu0 0.0
    %895 = vmatpush.msra.mxu0 0.0
    %896 = vmatpush.msra.mxu0 0.0
    %897 = vmatpush.msra.mxu0 0.0
    %898 = vmatpush.msra.mxu0 0.0
    %899 = vmatpush.msra.mxu0 0.0
    %900 = vmatpush.msra.mxu0 0.0
    %901 = vmatpush.msra.mxu0 0.0
    %902 = vmatpush.msra.mxu0 %v283
    %903 = vmatmul.f32.gmra.mxu0 %v220
    %v904 = vpop.f32.mrf.mxu0
    %v905 = vadd.f32 %v117, %v904
    %906 = vdwg.mxu0
    %907 = vmatpush.msra.mxu0 0.0
    %908 = vmatpush.msra.mxu0 0.0
    %909 = vmatpush.msra.mxu0 0.0
    %910 = vmatpush.msra.mxu0 0.0
    %911 = vmatpush.msra.mxu0 0.0
    %912 = vmatpush.msra.mxu0 0.0
    %913 = vmatpush.msra.mxu0 0.0
    %914 = vmatpush.msra.mxu0 0.0
    %915 = vmatpush.msra.mxu0 0.0
    %916 = vmatpush.msra.mxu0 0.0
    %917 = vmatpush.msra.mxu0 0.0
    %918 = vmatpush.msra.mxu0 0.0
    %919 = vmatpush.msra.mxu0 0.0
    %920 = vmatpush.msra.mxu0 0.0
    %921 = vmatpush.msra.mxu0 0.0
    %922 = vmatpush.msra.mxu0 %v285
    %923 = vmatmul.f32.gmra.mxu0 %v220
    %v924 = vpop.f32.mrf.mxu0
    %v925 = vadd.f32 %v118, %v924
    %926 = vdwg.mxu0
    %v927 = vmax.f32 %v305, 0.0
    %v928 = vmax.f32 %v325, 0.0
    %v929 = vmax.f32 %v345, 0.0
    %v930 = vmax.f32 %v365, 0.0
    %v931 = vmax.f32 %v385, 0.0
    %v932 = vmax.f32 %v405, 0.0
    %v933 = vmax.f32 %v425, 0.0
    %v934 = vmax.f32 %v445, 0.0
    %v935 = vmax.f32 %v465, 0.0
    %v936 = vmax.f32 %v485, 0.0
    %v937 = vmax.f32 %v505, 0.0
    %v938 = vmax.f32 %v525, 0.0
    %v939 = vmax.f32 %v545, 0.0
    %v940 = vmax.f32 %v565, 0.0
    %v941 = vmax.f32 %v585, 0.0
    %v942 = vmax.f32 %v605, 0.0
    %v943 = vmax.f32 %v625, 0.0
    %v944 = vmax.f32 %v645, 0.0
    %v945 = vmax.f32 %v665, 0.0
    %v946 = vmax.f32 %v685, 0.0
    %v947 = vmax.f32 %v705, 0.0
    %v948 = vmax.f32 %v725, 0.0
    %v949 = vmax.f32 %v745, 0.0
    %v950 = vmax.f32 %v765, 0.0
    %v951 = vmax.f32 %v785, 0.0
    %v952 = vmax.f32 %v805, 0.0
    %v953 = vmax.f32 %v825, 0.0
    %v954 = vmax.f32 %v845, 0.0
    %v955 = vmax.f32 %v865, 0.0
    %v956 = vmax.f32 %v885, 0.0
    %v957 = vmax.f32 %v905, 0.0
    %v958 = vmax.f32 %v925, 0.0
    %v959 = vld [vmem:[#allocation7] sm:$0xff]
    %v960 = vld [vmem:[#allocation7 + $0x8] sm:$0xff]
    %v961 = vld [vmem:[#allocation7 + $0x10] sm:$0xff]
    %v962 = vld [vmem:[#allocation7 + $0x18] sm:$0xff]
    %v967 = vperm.slane %v959, 0
    %v968 = vperm.slane %v959, 1
    %v969 = vperm.slane %v959, 2
    %v970 = vperm.slane %v959, 3
    %v971 = vperm.slane %v959, 4
    %v972 = vperm.slane %v959, 5
    %v973 = vperm.slane %v959, 6
    %v974 = vperm.slane %v959, 7
    %v975 = vperm.slane %v960, 0
    %v976 = vperm.slane %v960, 1
    %v977 = vperm.slane %v960, 2
    %v978 = vperm.slane %v960, 3
    %v979 = vperm.slane %v960, 4
    %v980 = vperm.slane %v960, 5
    %v981 = vperm.slane %v960, 6
    %v982 = vperm.slane %v960, 7
    %v983 = vperm.slane %v961, 0
    %v984 = vperm.slane %v961, 1
    %v985 = vperm.slane %v961, 2
    %v986 = vperm.slane %v961, 3
    %v987 = vperm.slane %v961, 4
    %v988 = vperm.slane %v961, 5
    %v989 = vperm.slane %v961, 6
    %v990 = vperm.slane %v961, 7
    %v991 = vperm.slane %v962, 0
    %v992 = vperm.slane %v962, 1
    %v993 = vperm.slane %v962, 2
    %v994 = vperm.slane %v962, 3
    %v995 = vperm.slane %v962, 4
    %v996 = vperm.slane %v962, 5
    %v997 = vperm.slane %v962, 6
    %v998 = vperm.slane %v962, 7
    %v1031 = vmul.f32 %v927, %v967
    %v1032 = vmul.f32 %v928, %v968
    %v1033 = vmul.f32 %v929, %v969
    %v1034 = vmul.f32 %v930, %v970
    %v1035 = vmul.f32 %v931, %v971
    %v1036 = vmul.f32 %v932, %v972
    %v1037 = vmul.f32 %v933, %v973
    %v1038 = vmul.f32 %v934, %v974
    %v1039 = vmul.f32 %v935, %v975
    %v1040 = vmul.f32 %v936, %v976
    %v1041 = vmul.f32 %v937, %v977
    %v1042 = vmul.f32 %v938, %v978
    %v1043 = vmul.f32 %v939, %v979
    %v1044 = vmul.f32 %v940, %v980
    %v1045 = vmul.f32 %v941, %v981
    %v1046 = vmul.f32 %v942, %v982
    %v1047 = vmul.f32 %v943, %v983
    %v1048 = vmul.f32 %v944, %v984
    %v1049 = vmul.f32 %v945, %v985
    %v1050 = vmul.f32 %v946, %v986
    %v1051 = vmul.f32 %v947, %v987
    %v1052 = vmul.f32 %v948, %v988
    %v1053 = vmul.f32 %v949, %v989
    %v1054 = vmul.f32 %v950, %v990
    %v1055 = vmul.f32 %v951, %v991
    %v1056 = vmul.f32 %v952, %v992
    %v1057 = vmul.f32 %v953, %v993
    %v1058 = vmul.f32 %v954, %v994
    %v1059 = vmul.f32 %v955, %v995
    %v1060 = vmul.f32 %v956, %v996
    %v1061 = vmul.f32 %v957, %v997
    %v1062 = vmul.f32 %v958, %v998
    %v1063 = vadd.f32 %v1031, %v1032
    %v1064 = vadd.f32 %v1033, %v1034
    %v1065 = vadd.f32 %v1035, %v1036
    %v1066 = vadd.f32 %v1037, %v1038
    %v1067 = vadd.f32 %v1039, %v1040
    %v1068 = vadd.f32 %v1041, %v1042
    %v1069 = vadd.f32 %v1043, %v1044
    %v1070 = vadd.f32 %v1045, %v1046
    %v1071 = vadd.f32 %v1047, %v1048
    %v1072 = vadd.f32 %v1049, %v1050
    %v1073 = vadd.f32 %v1051, %v1052
    %v1074 = vadd.f32 %v1053, %v1054
    %v1075 = vadd.f32 %v1055, %v1056
    %v1076 = vadd.f32 %v1057, %v1058
    %v1077 = vadd.f32 %v1059, %v1060
    %v1078 = vadd.f32 %v1061, %v1062
    %v1079 = vadd.f32 %v1063, %v1064
    %v1080 = vadd.f32 %v1065, %v1066
    %v1081 = vadd.f32 %v1067, %v1068
    %v1082 = vadd.f32 %v1069, %v1070
    %v1083 = vadd.f32 %v1071, %v1072
    %v1084 = vadd.f32 %v1073, %v1074
    %v1085 = vadd.f32 %v1075, %v1076
    %v1086 = vadd.f32 %v1077, %v1078
    %v1087 = vadd.f32 %v1079, %v1080
    %v1088 = vadd.f32 %v1081, %v1082
    %v1089 = vadd.f32 %v1083, %v1084
    %v1090 = vadd.f32 %v1085, %v1086
    %v1091 = vadd.f32 %v1087, %v1088
    %v1092 = vadd.f32 %v1089, %v1090
    %v1093 = vadd.f32 %v1091, %v1092
    %v1094 = vld [vmem:[%s4] sm:$0x1]
    %v1096 = vperm.slane %v1094, 0
    %v1098 = vadd.f32 %v1093, %v1096
    %1099 = vst [vmem:[#allocation8] sm:$0xff] %v1098
    // Predicated region
    $region34: #{tpu_custom_call.1} parent=1 // pred_check
      _
    $region35: #{tpu_custom_call.1} parent=1 // pred_check_branch
      %1101 = sbr.rel (0) target = $region37
    $region36: #{tpu_custom_call.1} parent=1 // pred_region
      %1103 = vsyncadd [#allocation4], 0
      %s1105 = sshll.u32 [#allocation8], 4
      %s1106 = int_to_ptr.vmem [resolvable:$true] %s1105
      %s1107 = sshll.u32 %s5, 4
      %s1108 = int_to_ptr.hbm [resolvable:$true] %s1107
      %1110 = dma.vmem_to_hbm [thread:$0]  %s1106, 128, %s1108, [#allocation4]
    $region37: #{tpu_custom_call.1} parent=1 // pred_fallthru
      _
    // Predicated region
    $region38: #{tpu_custom_call.1} parent=1 // pred_check
      _
    $region39: #{tpu_custom_call.1} parent=1 // pred_check_branch
      %1112 = sbr.rel (0) target = $region41
    $region40: #{tpu_custom_call.1} parent=1 // pred_region
      %1114 = dma.done [#allocation4], 128
    $region41: #{tpu_custom_call.1} parent=1 // pred_fallthru
      _
    %1115 = vsyncpa [#allocation3], 1
    %1116 = vsyncpa [#allocation6], 1
    %1117 = vsyncpa [#allocation4], 1

</llo_original>
